<compile_context>
chip_gen: v7x
topology: tpu7x:2x2x1
jax: 0.10.0
libtpu: 0.0.40
codegen_flags: <defaults>
</compile_context>

<pallas_src>
import functools

import jax
import jax.numpy as jnp
from jax import lax
from jax.experimental import pallas as pl
from jax.experimental.pallas import tpu as pltpu


# ----------------------------------------------------------------------------
# Pallas kernel: global min-max normalization (lane-dense, gridded)
# ----------------------------------------------------------------------------
def _minmax_reduce_kernel(x_ref, mn_ref, mx_ref):
    i = pl.program_id(0)
    x = x_ref[...]
    pmn = jnp.min(x, axis=0, keepdims=True)   # (1, 128) per-lane partial min
    pmx = jnp.max(x, axis=0, keepdims=True)

    @pl.when(i == 0)
    def _():
        mn_ref[...] = pmn
        mx_ref[...] = pmx

    @pl.when(i > 0)
    def _():
        mn_ref[...] = jnp.minimum(mn_ref[...], pmn)
        mx_ref[...] = jnp.maximum(mx_ref[...], pmx)


def _minmax_apply_kernel(s_ref, x_ref, o_ref):
    # s_ref: SMEM (2,) = [min, 1/(max-min)]  -> multiply, not divide
    o_ref[...] = ((x_ref[...] - s_ref[0]) * s_ref[1]).astype(o_ref.dtype)


def minmax_normalize(x):
    """(x - x.min()) / (x.max() - x.min()) over the whole tensor."""
    shape = x.shape
    flat = x.reshape(-1).astype(jnp.float32)
    numel = flat.shape[0]
    lane = 128
    rows = pl.cdiv(numel, lane)
    rows = pl.cdiv(rows, 8) * 8
    tile_rows = min(1024, rows)                 # 512 KiB f32 max per tile
    rows = pl.cdiv(rows, tile_rows) * tile_rows
    padded = rows * lane
    if padded != numel:
        # pad with an existing element so min/max are unaffected
        flat = jnp.concatenate(
            [flat, jnp.full((padded - numel,), flat[0], jnp.float32)])
    x2 = flat.reshape(rows, lane)
    num_tiles = rows // tile_rows

    mn_l, mx_l = pl.pallas_call(
        _minmax_reduce_kernel,
        grid=(num_tiles,),
        in_specs=[pl.BlockSpec((tile_rows, lane), lambda i: (i, 0))],
        out_specs=[pl.BlockSpec((1, lane), lambda i: (0, 0)),
                   pl.BlockSpec((1, lane), lambda i: (0, 0))],
        out_shape=[jax.ShapeDtypeStruct((1, lane), jnp.float32),
                   jax.ShapeDtypeStruct((1, lane), jnp.float32)],
        compiler_params=pltpu.CompilerParams(
            dimension_semantics=("arbitrary",)),
    )(x2)
    mn = jnp.min(mn_l)
    mx = jnp.max(mx_l)
    stats = jnp.stack([mn, 1.0 / (mx - mn)]).astype(jnp.float32)

    out = pl.pallas_call(
        _minmax_apply_kernel,
        grid=(num_tiles,),
        in_specs=[pl.BlockSpec(memory_space=pltpu.MemorySpace.SMEM),
                  pl.BlockSpec((tile_rows, lane), lambda i: (i, 0))],
        out_specs=pl.BlockSpec((tile_rows, lane), lambda i: (i, 0)),
        out_shape=jax.ShapeDtypeStruct((rows, lane), jnp.float32),
        compiler_params=pltpu.CompilerParams(
            dimension_semantics=("parallel",)),
    )(stats, x2)
    return out.reshape(-1)[:numel].reshape(shape)


# ----------------------------------------------------------------------------
# Pallas kernel: 1x1 convolution in NCHW (token dim in lanes)
# ----------------------------------------------------------------------------
def _pointwise_kernel(x_ref, w_ref, b_ref, o_ref):
    # x: (Cin, N), w: (Cout, Cin), b: (Cout, 1) -> (Cout, N), lane-dense
    y = jnp.dot(w_ref[...], x_ref[0], preferred_element_type=jnp.float32)
    o_ref[0] = (y + b_ref[...]).astype(o_ref.dtype)


def pointwise_conv(x_nchw, w, b=None):
    """1x1 conv: w (Cout, Cin), optional bias. NCHW in, NCHW out."""
    B, C, H, W = x_nchw.shape
    N = H * W
    Cout = w.shape[0]
    if b is None:
        b = jnp.zeros((Cout,), jnp.float32)
    x3 = x_nchw.reshape(B, C, N)
    out = pl.pallas_call(
        _pointwise_kernel,
        grid=(B,),
        in_specs=[
            pl.BlockSpec((1, C, N), lambda i: (i, 0, 0)),
            pl.BlockSpec((Cout, C), lambda i: (0, 0)),
            pl.BlockSpec((Cout, 1), lambda i: (0, 0)),
        ],
        out_specs=pl.BlockSpec((1, Cout, N), lambda i: (i, 0, 0)),
        out_shape=jax.ShapeDtypeStruct((B, Cout, N), jnp.float32),
        compiler_params=pltpu.CompilerParams(
            dimension_semantics=("parallel",)),
    )(x3, w, b.reshape(Cout, 1))
    return out.reshape(B, Cout, H, W)


# ----------------------------------------------------------------------------
# Pallas kernel: fused spectral multi-head self-attention
#   fused QKV proj -> per-head L2 norm -> K@Q^T -> softmax -> attn@V -> proj
#   one grid step per batch element, all heads handled inside.
# ----------------------------------------------------------------------------
def _ms_msa_kernel(rescale_ref, x_ref, wqkv_ref, wproj_ref, bproj_ref,
                   outc_ref, v_ref, *, heads, dim_head):
    C = heads * dim_head
    N = x_ref.shape[-1]
    x = x_ref[0]                                            # (C, N)
    qkv = jnp.dot(wqkv_ref[...], x,
                  preferred_element_type=jnp.float32)       # (3C, N)
    q = qkv[:C]
    k = qkv[C:2 * C]
    v = qkv[2 * C:]
    v_ref[0] = v.astype(v_ref.dtype)                        # needed for pos_emb

    wproj = wproj_ref[...]                                  # (C, C)
    acc = jnp.zeros((C, N), jnp.float32)
    for h in range(heads):                                  # heads is small/static
        qh = q[h * dim_head:(h + 1) * dim_head]             # (d, N)
        kh = k[h * dim_head:(h + 1) * dim_head]
        vh = v[h * dim_head:(h + 1) * dim_head]
        # F.normalize(p=2, dim=-1): x / max(||x||, 1e-12) via rsqrt (EUP)
        qn = qh * lax.rsqrt(
            jnp.maximum(jnp.sum(qh * qh, axis=-1, keepdims=True), 1e-24))
        kn = kh * lax.rsqrt(
            jnp.maximum(jnp.sum(kh * kh, axis=-1, keepdims=True), 1e-24))
        # attn = K @ Q^T -> (d, d)
        attn = lax.dot_general(
            kn, qn, dimension_numbers=(((1,), (1,)), ((), ())),
            preferred_element_type=jnp.float32)
        attn = attn * rescale_ref[h]
        attn = attn - jnp.max(attn, axis=-1, keepdims=True)
        p = jnp.exp(attn)
        p = p * pl.reciprocal(jnp.sum(p, axis=-1, keepdims=True), approx=True)
        oh = jnp.dot(p, vh, preferred_element_type=jnp.float32)   # (d, N)
        # fold this head directly into the output projection
        acc = acc + jnp.dot(wproj[:, h * dim_head:(h + 1) * dim_head], oh,
                            preferred_element_type=jnp.float32)
    outc_ref[0] = (acc + bproj_ref[...]).astype(outc_ref.dtype)


def gelu(x):
    return jax.nn.gelu(x, approximate=False)  # matches F.gelu (erf)


def conv2d(x, w, stride=1, padding=0, groups=1, bias=None):
    out = lax.conv_general_dilated(
        x, w,
        window_strides=(stride, stride),
        padding=((padding, padding), (padding, padding)),
        dimension_numbers=("NCHW", "OIHW", "NCHW"),
        feature_group_count=groups,
    )
    if bias is not None:
        out = out + bias[None, :, None, None]
    return out


def conv_transpose2d_k2s2(x, w, b):
    # PyTorch ConvTranspose2d(Cin, Cout, kernel_size=2, stride=2); w: (Cin,Cout,2,2)
    w_flip = w[:, :, ::-1, ::-1]
    w_oihw = jnp.transpose(w_flip, (1, 0, 2, 3))
    out = lax.conv_general_dilated(
        x, w_oihw,
        window_strides=(1, 1),
        padding=((1, 1), (1, 1)),
        lhs_dilation=(2, 2),
        dimension_numbers=("NCHW", "OIHW", "NCHW"),
    )
    return out + b[None, :, None, None]


def ms_msa(x_nchw, p):
    B, C, H, W = x_nchw.shape
    N = H * W
    heads = p["rescale"].shape[0]
    d = C // heads
    x3 = x_nchw.reshape(B, C, N)
    kern = functools.partial(_ms_msa_kernel, heads=heads, dim_head=d)
    outc, v = pl.pallas_call(
        kern,
        grid=(B,),
        in_specs=[
            pl.BlockSpec(memory_space=pltpu.MemorySpace.SMEM),   # rescale
            pl.BlockSpec((1, C, N), lambda b: (b, 0, 0)),        # x
            pl.BlockSpec((3 * C, C), lambda b: (0, 0)),          # wqkv (fused)
            pl.BlockSpec((C, C), lambda b: (0, 0)),              # wproj
            pl.BlockSpec((C, 1), lambda b: (0, 0)),              # bproj
        ],
        out_specs=[pl.BlockSpec((1, C, N), lambda b: (b, 0, 0)),
                   pl.BlockSpec((1, C, N), lambda b: (b, 0, 0))],
        out_shape=[jax.ShapeDtypeStruct((B, C, N), jnp.float32),
                   jax.ShapeDtypeStruct((B, C, N), jnp.float32)],
        compiler_params=pltpu.CompilerParams(
            dimension_semantics=("parallel",)),
    )(p["rescale"], x3, p["wqkv"], p["wproj"], p["bproj"].reshape(C, 1))
    out_c = outc.reshape(B, C, H, W)
    v_img = v.reshape(B, C, H, W)
    # positional embedding: two depthwise 3x3 convs with GELU between
    pe = conv2d(v_img, p["pe_w1"], padding=1, groups=C)
    pe = gelu(pe)
    pe = conv2d(pe, p["pe_w2"], padding=1, groups=C)
    return out_c + pe


def feed_forward(x_nchw, p):
    hidden = p["w1"].shape[0]
    h1 = gelu(pointwise_conv(x_nchw, p["w1"]))                 # 1x1  C -> 4C
    h1 = gelu(conv2d(h1, p["dw"], padding=1, groups=hidden))   # depthwise 3x3
    return pointwise_conv(h1, p["w2"])                         # 1x1 4C -> C


def msab(x_nchw, blocks):
    x = x_nchw
    for blk in blocks:
        x = ms_msa(x, blk["msa"]) + x
        x = feed_forward(x, blk["ffn"]) + x
    return x


def sst_forward(x, p):
    fea = conv2d(x, p["embedding"], padding=1)
    enc_feats = []
    for lvl in p["encoder"]:
        fea = msab(fea, lvl["msab"])
        enc_feats.append(fea)
        fea = conv2d(fea, lvl["down"], stride=2, padding=1)
    fea = msab(fea, p["bottleneck"])
    n_enc = len(p["encoder"])
    for i, lvl in enumerate(p["decoder"]):
        fea = conv_transpose2d_k2s2(fea, lvl["up_w"], lvl["up_b"])
        skip = enc_feats[n_enc - 1 - i]
        cat = jnp.concatenate([fea, skip], axis=1)
        fea = pointwise_conv(cat, lvl["fusion"])               # 1x1 fusion conv
        fea = msab(fea, lvl["msab"])
    return conv2d(fea, p["mapping"], padding=1) + x


def mst_plus_plus_forward(x, p):
    b, c, h_inp, w_inp = x.shape
    hb = wb = 8
    pad_h = (hb - h_inp % hb) % hb
    pad_w = (wb - w_inp % wb) % wb
    if pad_h or pad_w:
        x = jnp.pad(x, ((0, 0), (0, 0), (0, pad_h), (0, pad_w)), mode="reflect")
    fea = conv2d(x, p["conv_in"], padding=1)
    h = fea
    for stage_p in p["body"]:
        h = sst_forward(h, stage_p)
    out = conv2d(h, p["conv_out"], padding=1) + fea
    return (h[:, :, :h_inp, :w_inp], out[:, :, :h_inp, :w_inp])


def mst_forward(x, params):
    """R3ST MST.forward: returns (temp, Spectral_wise_Transformer(norm(x))[1])."""
    temp = x
    xn = minmax_normalize(x)
    out = mst_plus_plus_forward(xn, params)[1]
    return temp, out


# ----------------------------------------------------------------------------
# Deterministic parameter initialization
# ----------------------------------------------------------------------------
class KeyGen:
    def __init__(self, key):
        self.key = key

    def __call__(self, shape, scale=0.05):
        self.key, sub = jax.random.split(self.key)
        return scale * jax.random.normal(sub, shape, dtype=jnp.float32)


def init_msa(kg, dim, dim_head, heads):
    c = dim_head * heads
    return dict(
        wqkv=kg((3 * c, dim)),                 # fused Wq|Wk|Wv, (out, in)
        rescale=jnp.ones((heads,), jnp.float32),
        wproj=kg((dim, c)),                    # (out, in)
        bproj=jnp.zeros((dim,), jnp.float32),
        pe_w1=kg((dim, 1, 3, 3)),
        pe_w2=kg((dim, 1, 3, 3)),
    )


def init_ffn(kg, dim, mult=4):
    return dict(
        w1=kg((dim * mult, dim)),
        dw=kg((dim * mult, 1, 3, 3)),
        w2=kg((dim, dim * mult)),
    )


def init_msab(kg, dim, dim_head, heads, num_blocks):
    return [
        dict(msa=init_msa(kg, dim, dim_head, heads), ffn=init_ffn(kg, dim))
        for _ in range(num_blocks)
    ]


def init_sst(kg, dim=8, stage=1, num_blocks=(1, 1)):
    p = dict(embedding=kg((dim, dim, 3, 3)))
    enc = []
    dim_stage = dim
    for i in range(stage):
        enc.append(dict(
            msab=init_msab(kg, dim_stage, dim, dim_stage // dim, num_blocks[i]),
            down=kg((dim_stage * 2, dim_stage, 4, 4)),
        ))
        dim_stage *= 2
    p["encoder"] = enc
    p["bottleneck"] = init_msab(kg, dim_stage, dim, dim_stage // dim, num_blocks[-1])
    dec = []
    for i in range(stage):
        dec.append(dict(
            up_w=kg((dim_stage, dim_stage // 2, 2, 2)),
            up_b=jnp.zeros((dim_stage // 2,), jnp.float32),
            fusion=kg((dim_stage // 2, dim_stage)),   # (out, in) 1x1 conv
            msab=init_msab(kg, dim_stage // 2, dim, (dim_stage // 2) // dim,
                           num_blocks[stage - 1 - i]),
        ))
        dim_stage //= 2
    p["decoder"] = dec
    p["mapping"] = kg((dim, dim, 3, 3))
    return p


def init_mst_plus_plus(kg, in_c=3, n_feat=8, out_c=8, stage=1):
    return dict(
        conv_in=kg((n_feat, in_c, 3, 3)),
        body=[init_sst(kg, dim=n_feat, stage=1, num_blocks=(1, 1))
              for _ in range(stage)],
        conv_out=kg((out_c, n_feat, 3, 3)),
    )


# ----------------------------------------------------------------------------
if __name__ == "__main__":
    key = jax.random.PRNGKey(0)
    k_x, k_p = jax.random.split(key)
    # NCHW input, RGB-like image
    x = jax.random.normal(k_x, (2, 3, 16, 16), dtype=jnp.float32)
    params = init_mst_plus_plus(KeyGen(k_p))

    temp, out = mst_forward(x, params)
    jax.block_until_ready((temp, out))
    assert temp.shape == (2, 3, 16, 16)
    assert out.shape == (2, 8, 16, 16)
    print("KERNEL_OK")
</pallas_src>

<mosaic_0001>
module attributes {stable_mosaic.version = 11 : i64} {
  func.func @_minmax_reduce_kernel(%arg0: i32, %arg1: memref<16x128xf32, #tpu.memory_space<vmem>>, %arg2: memref<1x128xf32, #tpu.memory_space<vmem>>, %arg3: memref<1x128xf32, #tpu.memory_space<vmem>>) attributes {dimension_semantics = [#tpu.dimension_semantics<arbitrary>], iteration_bounds = array<i64: 1>, scalar_prefetch = 0 : i64, scratch_operands = 0 : i64, tpu.core_type = #tpu.core_type<tc>, window_params = [{transform_indices = @transform_0, window_bounds = array<i64: 16, 128>}, {pipeline_mode = #tpu.pipeline_mode<synchronous>, transform_indices = @transform_1, window_bounds = array<i64: 1, 128>}, {pipeline_mode = #tpu.pipeline_mode<synchronous>, transform_indices = @transform_2, window_bounds = array<i64: 1, 128>}]} {
    %c0 = arith.constant 0 : index
    %c0_0 = arith.constant 0 : index
    %0 = vector.load %arg1[%c0, %c0_0] : memref<16x128xf32, #tpu.memory_space<vmem>>, vector<16x128xf32>
    %cst = arith.constant dense<0x7F800000> : vector<128xf32>
    %1 = vector.multi_reduction <minimumf>, %0, %cst [0] : vector<16x128xf32> to vector<128xf32>
    %2 = vector.shape_cast %1 : vector<128xf32> to vector<1x128xf32>
    %cst_1 = arith.constant dense<0xFF800000> : vector<128xf32>
    %3 = vector.multi_reduction <maximumf>, %0, %cst_1 [0] : vector<16x128xf32> to vector<128xf32>
    %4 = vector.shape_cast %3 : vector<128xf32> to vector<1x128xf32>
    %c0_i32 = arith.constant 0 : i32
    %5 = arith.cmpi eq, %arg0, %c0_i32 : i32
    %6 = arith.extui %5 : i1 to i32
    %c0_i32_2 = arith.constant 0 : i32
    %7 = arith.cmpi ne, %6, %c0_i32_2 : i32
    scf.if %7 {
      %c0_5 = arith.constant 0 : index
      %c0_6 = arith.constant 0 : index
      %11 = vector.load %arg2[%c0_5, %c0_6] : memref<1x128xf32, #tpu.memory_space<vmem>>, vector<1x128xf32>
      tpu.vector_store %arg2[%c0_5, %c0_6], %2 {strides = array<i32>} : memref<1x128xf32, #tpu.memory_space<vmem>>, vector<1x128xf32>,
      %c0_7 = arith.constant 0 : index
      %c0_8 = arith.constant 0 : index
      %12 = vector.load %arg3[%c0_7, %c0_8] : memref<1x128xf32, #tpu.memory_space<vmem>>, vector<1x128xf32>
      tpu.vector_store %arg3[%c0_7, %c0_8], %4 {strides = array<i32>} : memref<1x128xf32, #tpu.memory_space<vmem>>, vector<1x128xf32>,
    } else {
    }
    %c0_i32_3 = arith.constant 0 : i32
    %8 = arith.cmpi sgt, %arg0, %c0_i32_3 : i32
    %9 = arith.extui %8 : i1 to i32
    %c0_i32_4 = arith.constant 0 : i32
    %10 = arith.cmpi ne, %9, %c0_i32_4 : i32
    scf.if %10 {
      %c0_5 = arith.constant 0 : index
      %c0_6 = arith.constant 0 : index
      %11 = vector.load %arg2[%c0_5, %c0_6] : memref<1x128xf32, #tpu.memory_space<vmem>>, vector<1x128xf32>
      %12 = arith.minimumf %11, %2 : vector<1x128xf32>
      %c0_7 = arith.constant 0 : index
      %c0_8 = arith.constant 0 : index
      %13 = vector.load %arg2[%c0_7, %c0_8] : memref<1x128xf32, #tpu.memory_space<vmem>>, vector<1x128xf32>
      tpu.vector_store %arg2[%c0_7, %c0_8], %12 {strides = array<i32>} : memref<1x128xf32, #tpu.memory_space<vmem>>, vector<1x128xf32>,
      %c0_9 = arith.constant 0 : index
      %c0_10 = arith.constant 0 : index
      %14 = vector.load %arg3[%c0_9, %c0_10] : memref<1x128xf32, #tpu.memory_space<vmem>>, vector<1x128xf32>
      %15 = arith.maximumf %14, %4 : vector<1x128xf32>
      %c0_11 = arith.constant 0 : index
      %c0_12 = arith.constant 0 : index
      %16 = vector.load %arg3[%c0_11, %c0_12] : memref<1x128xf32, #tpu.memory_space<vmem>>, vector<1x128xf32>
      tpu.vector_store %arg3[%c0_11, %c0_12], %15 {strides = array<i32>} : memref<1x128xf32, #tpu.memory_space<vmem>>, vector<1x128xf32>,
    } else {
    }
    return
  }
  func.func @transform_0(%arg0: i32) -> (i32, i32) {
    %c0_i32 = arith.constant 0 : i32
    %c0_i32_0 = arith.constant 0 : i32
    return %arg0, %c0_i32 : i32, i32
  }
  func.func @transform_1(%arg0: i32) -> (i32, i32) {
    %c0_i32 = arith.constant 0 : i32
    %c0_i32_0 = arith.constant 0 : i32
    %c0_i32_1 = arith.constant 0 : i32
    return %c0_i32, %c0_i32_0 : i32, i32
  }
  func.func @transform_2(%arg0: i32) -> (i32, i32) {
    %c0_i32 = arith.constant 0 : i32
    %c0_i32_0 = arith.constant 0 : i32
    %c0_i32_1 = arith.constant 0 : i32
    return %c0_i32, %c0_i32_0 : i32, i32
  }
}

</mosaic_0001>

<llo_original>
// kernel: tpu_custom_call.1
$region0: #{tpu_custom_call.1}
  #allocation0 [shape = 'u32[]', space=smem, size = 0x4, offset = 0x4, fixed_abs, tag = 'smem constant byte address 0x4 - core index']
  #allocation1 [shape = 'u32[144,128]{1,0:T(1,128)}', space=vmem, size = 0x12000, scoped, tag = 'internal scratch']
  %s0 = inlined_call_operand.hbm [shape: f32[16,128], index: 0, kind: input, shape index: {}]
  %s1 = inlined_call_operand.hbm [shape: f32[1,128], index: 1, kind: output, shape index: {0}]
  %s2 = inlined_call_operand.hbm [shape: f32[1,128], index: 2, kind: output, shape index: {1}]
  %3 = xla_tuple %s1, %s2
  %s4 = sld [smem:[#allocation0]]
  $region34: #{tpu_custom_call.1} parent=0
    _
  %s6 = ssub.s32 1, %s4
  %s7 = scalar_select 0, %s6, %s4
  $region1: #{tpu_custom_call.1} parent=0
    #allocation2 [shape = 'u8[8192]{0}', space=vmem, size = 0x2000, scoped, tag = 'input window, operand 0, single buffered']
    #allocation3 [shape = 's32[1]{0}', space=sflag, size = 0x4, scoped, tag = 'scoped memory for tpu_custom_call.1']
    #allocation4 [shape = 's32[1]{0}', space=sflag, size = 0x4, scoped, tag = 'scoped memory for tpu_custom_call.1']
    #allocation5 [shape = 'u8[512]{0}', space=vmem, size = 0x400, scoped, tag = 'output window, operand 0, single buffered']
    #allocation6 [shape = 'u8[512]{0}', space=vmem, size = 0x400, scoped, tag = 'output window, operand 1, single buffered']
    #allocation7 [shape = 's32[1]{0}', space=sflag, size = 0x4, scoped, tag = 'scoped memory for tpu_custom_call.1']
    %8 = vsyncpa [#allocation3], 0
    %9 = vsyncpa [#allocation4], 0
    %10 = vsyncpa [#allocation7], 0
    // Predicated region
    $region2: #{tpu_custom_call.1} parent=1 // pred_check
      _
    $region3: #{tpu_custom_call.1} parent=1 // pred_check_branch
      %12 = sbr.rel (0) target = $region5
    $region4: #{tpu_custom_call.1} parent=1 // pred_region
      %s14 = ssub.s32 256, 256
      %15 = vsyncadd [#allocation3], %s14
      %s16 = sshll.u32 [#allocation2], 4
      %s17 = int_to_ptr.vmem [resolvable:$true] %s16
      %22 = dma.hbm_to_vmem [thread:$0]  %s0, 256, %s17, [#allocation3], 128, 128, 8
    $region5: #{tpu_custom_call.1} parent=1 // pred_fallthru
      _
    // Predicated region
    $region6: #{tpu_custom_call.1} parent=1 // pred_check
      _
    $region7: #{tpu_custom_call.1} parent=1 // pred_check_branch
      %24 = sbr.rel (0) target = $region9
    $region8: #{tpu_custom_call.1} parent=1 // pred_region
      %25 = dma.done [#allocation3], 256
    $region9: #{tpu_custom_call.1} parent=1 // pred_fallthru
      _
    %v26 = vld [vmem:[#allocation2] sm:$0xff]
    %v27 = vld [vmem:[#allocation2 + $0x8] sm:$0xff]
    %v28 = vmin.f32 %v26, %v27
    %v29 = vrot.slane %v28, 4
    %v30 = vmin.f32 %v28, %v29
    %v31 = vrot.slane %v30, 2
    %v32 = vmin.f32 %v30, %v31
    %v33 = vrot.slane %v32, 1
    %v34 = vmin.f32 %v32, %v33
    %v35 = vmax.f32 %v26, %v27
    %v36 = vrot.slane %v35, 4
    %v37 = vmax.f32 %v35, %v36
    %v38 = vrot.slane %v37, 2
    %v39 = vmax.f32 %v37, %v38
    %v40 = vrot.slane %v39, 1
    %v41 = vmax.f32 %v39, %v40
    %p42 = scmp.eq.s32.totalorder 0, 0
    // Predicated region
    $region10: #{tpu_custom_call.1} parent=1 // pred_check
      %p43 = pneg %p42
    $region11: #{tpu_custom_call.1} parent=1 // pred_check_branch
      %45 = sbr.rel (%p43) target = $region13
    $region12: #{tpu_custom_call.1} parent=1 // pred_region
      %46 = vst [vmem:[#allocation5] sm:$0x1] %v34
      %47 = vst [vmem:[#allocation6] sm:$0x1] %v41
    $region13: #{tpu_custom_call.1} parent=1 // pred_fallthru
      _
    %p48 = scmp.gt.s32.totalorder 0, 0
    // Predicated region
    $region14: #{tpu_custom_call.1} parent=1 // pred_check
      %p49 = pneg %p48
    $region15: #{tpu_custom_call.1} parent=1 // pred_check_branch
      %51 = sbr.rel (%p49) target = $region17
    $region16: #{tpu_custom_call.1} parent=1 // pred_region
      %v52 = vld [vmem:[#allocation5] sm:$0x1]
      %v53 = vmin.f32 %v52, %v34
      %54 = vst [vmem:[#allocation5] sm:$0x1] %v53
      %v55 = vld [vmem:[#allocation6] sm:$0x1]
      %v56 = vmax.f32 %v55, %v41
      %57 = vst [vmem:[#allocation6] sm:$0x1] %v56
    $region17: #{tpu_custom_call.1} parent=1 // pred_fallthru
      _
    // Predicated region
    $region18: #{tpu_custom_call.1} parent=1 // pred_check
      _
    $region19: #{tpu_custom_call.1} parent=1 // pred_check_branch
      %59 = sbr.rel (0) target = $region21
    $region20: #{tpu_custom_call.1} parent=1 // pred_region
      %s61 = ssub.s32 16, 16
      %62 = vsyncadd [#allocation4], %s61
      %s64 = sshll.u32 [#allocation5], 4
      %s65 = int_to_ptr.vmem [resolvable:$true] %s64
      %67 = dma.vmem_to_hbm [thread:$0]  %s65, 16, %s1, [#allocation4]
    $region21: #{tpu_custom_call.1} parent=1 // pred_fallthru
      _
    // Predicated region
    $region22: #{tpu_custom_call.1} parent=1 // pred_check
      _
    $region23: #{tpu_custom_call.1} parent=1 // pred_check_branch
      %69 = sbr.rel (0) target = $region25
    $region24: #{tpu_custom_call.1} parent=1 // pred_region
      %s71 = ssub.s32 16, 16
      %72 = vsyncadd [#allocation7], %s71
      %s74 = sshll.u32 [#allocation6], 4
      %s75 = int_to_ptr.vmem [resolvable:$true] %s74
      %77 = dma.vmem_to_hbm [thread:$0]  %s75, 16, %s2, [#allocation7]
    $region25: #{tpu_custom_call.1} parent=1 // pred_fallthru
      _
    // Predicated region
    $region26: #{tpu_custom_call.1} parent=1 // pred_check
      _
    $region27: #{tpu_custom_call.1} parent=1 // pred_check_branch
      %79 = sbr.rel (0) target = $region29
    $region28: #{tpu_custom_call.1} parent=1 // pred_region
      %80 = dma.done [#allocation4], 16
    $region29: #{tpu_custom_call.1} parent=1 // pred_fallthru
      _
    // Predicated region
    $region30: #{tpu_custom_call.1} parent=1 // pred_check
      _
    $region31: #{tpu_custom_call.1} parent=1 // pred_check_branch
      %82 = sbr.rel (0) target = $region33
    $region32: #{tpu_custom_call.1} parent=1 // pred_region
      %83 = dma.done [#allocation7], 16
    $region33: #{tpu_custom_call.1} parent=1 // pred_fallthru
      _
    %84 = vsyncpa [#allocation3], 1
    %85 = vsyncpa [#allocation4], 1
    %86 = vsyncpa [#allocation7], 1

</llo_original>
